<compile_context>
chip_gen: v5e
topology: v5e:2x2
jax: 0.10.0
libtpu: 0.0.40
codegen_flags: <defaults>
</compile_context>

<pallas_src>
import jax
import jax.numpy as jnp
from jax.experimental import pallas as pl
from jax.experimental.pallas import tpu as pltpu

# ---- small synthetic sizes (consistent with the module's shapes) ----
B = 2          # args.batch_size (documents per mini-batch)
V = 32         # args.vocab_size
NI = 16        # word-embedding dim (word_vec.shape[1] == args.ni)
NW = 16        # args.nw   (GNN hidden)
H = 32         # args.enc_nh
K = 8          # args.num_topic
N_NODES = 16   # word-nodes per mini-batch graph
E = 12         # graph edges per mini-batch
BN_EPS = 1e-5
BN_SCALE = (1.0 + BN_EPS) ** -0.5     # eval-mode BatchNorm (mu=0, var=1, gamma=1)


def _pad8(n):
    return ((n + 7) // 8) * 8


# ---- per-mini-batch activation slab layout (one input DMA per grid step) ----
ROW_DOC = 0                         # rows [0, B)          lanes [0, V) : doc BOW
ROW_IDXW = B                        # row                  lanes [0, N) : self-loop weights
ROW_EW = B + 1                      # row                  lanes [0, E) : edge weights
ROW_XB = B + 2                      # row                  lanes [0, N) : doc id per node
ROW_DST = B + 3                     # row                  lanes [0, E) : edge targets
BAND_A = _pad8(B + 4)
ROW_IDXX = BAND_A                   # rows [BAND_A, +N)    lane 0       : word id per node (column)
ROW_SRC = BAND_A + _pad8(N_NODES)   # rows [ROW_SRC, +E)   lane 0       : edge sources (column)
ACT_ROWS = ROW_SRC + _pad8(E)

# ---- per-mini-batch output slab layout (one lane-dense store per grid step) ----
OUT_LANES = 128
OUT_ROWS = _pad8(B + 1)
assert B + 4 <= BAND_A and B + 1 <= OUT_ROWS and K + 3 <= OUT_LANES


# --------------------------------------------------------------------------
# Host-side: pre-transpose / un-fuse weights, precompute beta, shelf-pack into
# one lane-dense (rows, 128) f32 slab.
# --------------------------------------------------------------------------
def pack_params(p):
    f32 = jnp.float32

    def t(a):
        return jnp.asarray(a, f32).T

    w1 = t(p['enc2_fc1_w'])            # (NW+NI, H): rows [0,NW) multiply enc1, [NW,..) multiply x
    w2 = t(p['enc2_fc2_w'])
    beta = jax.nn.softmax(
        jnp.asarray(p['topic_vec'], f32) @ jnp.asarray(p['word_vec'], f32).T, axis=-1)
    # TODO(synk): beta is precomputed for eval / frozen weights; move the
    # softmax(topic_vec @ word_vec.T) back in-kernel if weights change per call.

    entries = [
        ('W_rel', t(p['gnn_wrel'])), ('W_root', t(p['gnn_wroot'])), ('b_gnn', p['gnn_brel']),
        ('W1_enc', w1[:NW]), ('W1_x', w1[NW:]), ('b_fc1', p['enc2_fc1_b']),
        ('W2_enc', w2[:NW]), ('W2_x', w2[NW:]), ('b_fc2', p['enc2_fc2_b']),
        ('Wg_mean', t(p['ge_mean_w'])), ('bg_mean', p['ge_mean_b']),
        ('Wg_logvar', t(p['ge_logvar_w'])), ('bg_logvar', p['ge_logvar_b']),
        ('W_e1', t(p['enc1_fc_w'])), ('b_e1', p['enc1_fc_b']),
        ('W_e2', t(p['enc2_fc_w'])), ('b_e2', p['enc2_fc_b']),
        ('Wp_mean', t(p['mean_fc_w'])), ('bp_mean', p['mean_fc_b']),
        ('Wp_logvar', t(p['logvar_fc_w'])), ('bp_logvar', p['logvar_fc_b']),
        ('W_dec', t(p['decoder_w'])), ('b_dec', p['decoder_b']),
        ('beta', beta), ('word_vec', p['word_vec']),
    ]

    # Shelf packing: blocks with the same sublane-padded height share a
    # 128-lane row band, placed side by side in the lane dimension.
    groups = {}
    for name, a in entries:
        a = jnp.asarray(a, f32)
        groups.setdefault(_pad8(a.shape[0]), []).append((name, a))

    shelves = []                                   # (band_height, [(name, array, col0), ...])
    for hp in sorted(groups):
        col, items = 0, []
        for name, a in groups[hp]:
            w = a.shape[1]
            if col + w > 128:
                shelves.append((hp, items))
                col, items = 0, []
            items.append((name, a, col))
            col += w
        shelves.append((hp, items))

    total_rows = sum(hp for hp, _ in shelves)
    slab = jnp.zeros((total_rows, 128), f32)
    off, row = {}, 0
    for hp, items in shelves:
        for name, a, col in items:
            h, w = a.shape
            slab = slab.at[row:row + h, col:col + w].set(a)
            off[name] = (row, col, h, w)
        row += hp
    return slab, off


# --------------------------------------------------------------------------
# Fused kernel + wrapper
# --------------------------------------------------------------------------
def build_gsm_forward(p):
    slab, off = pack_params(p)
    w_rows = slab.shape[0]

    def fused_kernel(slab_ref, act_ref, out_ref):
        f32 = jnp.float32
        iota = jax.lax.broadcasted_iota

        def W(name):                               # static sub-rectangle of the weight slab
            r, c, h, w = off[name]
            return slab_ref[r:r + h, c:c + w]

        def softmax(x):
            e = jnp.exp(x - jnp.max(x, axis=-1, keepdims=True))
            return e / jnp.sum(e, axis=-1, keepdims=True)

        # ---- unpack the per-mini-batch activation slab (indices stored as floats) ----
        doc = act_ref[ROW_DOC:ROW_DOC + B, 0:V]                                  # (B, V)
        idx_w = act_ref[ROW_IDXW:ROW_IDXW + 1, 0:N_NODES]                        # (1, N)
        edge_w = act_ref[ROW_EW:ROW_EW + 1, 0:E]                                 # (1, E)
        xb = act_ref[ROW_XB:ROW_XB + 1, 0:N_NODES].astype(jnp.int32)             # (1, N)
        dst = act_ref[ROW_DST:ROW_DST + 1, 0:E].astype(jnp.int32)                # (1, E)
        idxx = act_ref[ROW_IDXX:ROW_IDXX + N_NODES, 0:1].astype(jnp.int32)       # (N, 1)
        src = act_ref[ROW_SRC:ROW_SRC + E, 0:1].astype(jnp.int32)                # (E, 1)

        # ---- on-chip glue: embedding gather + weighted adjacency + doc selector ----
        onehot_x = (iota(jnp.int32, (N_NODES, V), 1) == idxx).astype(f32)        # (N, V)
        x = jnp.dot(onehot_x, W('word_vec'), preferred_element_type=f32)         # (N, NI)

        oh_dst = (iota(jnp.int32, (N_NODES, E), 0) == dst).astype(f32)           # (N, E)
        oh_src = (iota(jnp.int32, (E, N_NODES), 1) == src).astype(f32)           # (E, N)
        adj = jnp.dot(oh_dst * edge_w, oh_src, preferred_element_type=f32)       # (N, N)
        eye = (iota(jnp.int32, (N_NODES, N_NODES), 0)
               == iota(jnp.int32, (N_NODES, N_NODES), 1)).astype(f32)
        adj = adj + eye * idx_w                                                  # self loops (idx_w)

        sel = (iota(jnp.int32, (B, N_NODES), 0) == xb).astype(f32)               # (B, N)

        # ---- GNNDir2encoder (split dots: no lane concats / lane-offset slices) ----
        agg = jnp.dot(adj, x, preferred_element_type=f32)                        # (N, NI)
        gnn = (jnp.dot(agg, W('W_rel'), preferred_element_type=f32)
               + jnp.dot(x, W('W_root'), preferred_element_type=f32)
               + W('b_gnn'))                                                     # (N, NW)
        enc1 = jnp.tanh(gnn * BN_SCALE)                                          # tanh(bn_gnn1)

        pre1 = (jnp.dot(enc1, W('W1_enc'), preferred_element_type=f32)
                + jnp.dot(x, W('W1_x'), preferred_element_type=f32) + W('b_fc1'))  # (N, H)
        pre2 = (jnp.dot(enc1, W('W2_enc'), preferred_element_type=f32)
                + jnp.dot(x, W('W2_x'), preferred_element_type=f32) + W('b_fc2'))  # (N, H)
        g = jax.nn.sigmoid(pre1) * jnp.tanh(pre2)                                # (N, H)

        enc2 = jnp.dot(sel, g, preferred_element_type=f32)                       # (B, H) scatter-sum
        post_mean = (jnp.dot(enc2, W('Wg_mean'), preferred_element_type=f32)
                     + W('bg_mean')) * BN_SCALE                                  # mean_bn(mean_fc)
        post_logvar = (jnp.dot(enc2, W('Wg_logvar'), preferred_element_type=f32)
                       + W('bg_logvar'))
        # TODO(synk): phi = softmax(phi_fc([enc1|x|enc2[x_batch]])) is only consumed by
        # the epoch >= train_topic structure branch and is skipped here (dead work).

        # ---- GSM topic head ----
        h1 = jnp.tanh(jnp.dot(doc, W('W_e1'), preferred_element_type=f32) + W('b_e1'))
        h2 = jnp.tanh(jnp.dot(h1, W('W_e2'), preferred_element_type=f32) + W('b_e2'))
        prior_mean = jnp.dot(h2, W('Wp_mean'), preferred_element_type=f32) + W('bp_mean')
        prior_logvar = jnp.dot(h2, W('Wp_logvar'), preferred_element_type=f32) + W('bp_logvar')

        theta = softmax(jnp.dot(prior_mean, W('W_dec'), preferred_element_type=f32)
                        + W('b_dec'))                                            # (B, K)
        recon = jnp.dot(theta, W('beta'), preferred_element_type=f32)            # (B, V)
        nl = -jnp.sum(doc * jnp.log(recon + 1e-10), axis=1, keepdims=True)       # (B, 1)

        post_var = jnp.exp(post_logvar)
        prior_var = jnp.exp(prior_logvar)
        kl1 = 0.5 * jnp.sum(
            prior_logvar - post_logvar
            + (post_var + (post_mean - prior_mean) ** 2) / prior_var - 1.0,
            axis=-1, keepdims=True)                                              # (B, 1)
        kl2 = -0.5 * jnp.sum(1.0 - post_mean ** 2 + post_logvar - post_var,
                             axis=1, keepdims=True)                              # (B, 1)

        # batch means (recon_structure == 0 in the epoch < train_topic branch)
        inv_b = 1.0 / B
        loss_m = jnp.sum(nl + kl1 + kl2, axis=0, keepdims=True) * inv_b          # (1, 1)
        nl_m = jnp.sum(nl, axis=0, keepdims=True) * inv_b
        kl1_m = jnp.sum(kl1, axis=0, keepdims=True) * inv_b
        kl2_m = jnp.sum(kl2, axis=0, keepdims=True) * inv_b

        # one lane-dense output slab per mini-batch, single full (8,128) store
        per_doc = jnp.concatenate(
            [theta, nl, kl1, kl2, jnp.zeros((B, OUT_LANES - (K + 3)), f32)], axis=-1)
        scalars = jnp.concatenate(
            [loss_m, nl_m, kl1_m, kl2_m, jnp.zeros((1, OUT_LANES - 4), f32)], axis=-1)
        out_ref[...] = jnp.concatenate(
            [per_doc, scalars, jnp.zeros((OUT_ROWS - B - 1, OUT_LANES), f32)], axis=0)

    @jax.jit
    def _forward_batched(idx_x, idx_w, x_batch, edge_index, edge_w, doc_input):
        f32 = jnp.float32
        G = doc_input.shape[0]

        # pack the 7 per-mini-batch runtime inputs into one activation slab each
        act = jnp.zeros((G, ACT_ROWS, 128), f32)
        act = act.at[:, ROW_DOC:ROW_DOC + B, 0:V].set(doc_input.astype(f32))
        act = act.at[:, ROW_IDXW, 0:N_NODES].set(idx_w.astype(f32))
        act = act.at[:, ROW_EW, 0:E].set(edge_w.astype(f32))
        act = act.at[:, ROW_XB, 0:N_NODES].set(x_batch.astype(f32))
        act = act.at[:, ROW_DST, 0:E].set(edge_index[:, 1, :].astype(f32))
        act = act.at[:, ROW_IDXX:ROW_IDXX + N_NODES, 0].set(idx_x.astype(f32))
        act = act.at[:, ROW_SRC:ROW_SRC + E, 0].set(edge_index[:, 0, :].astype(f32))
        act = act.reshape(G * ACT_ROWS, 128)

        out = pl.pallas_call(
            fused_kernel,
            out_shape=jax.ShapeDtypeStruct((G * OUT_ROWS, OUT_LANES), jnp.float32),
            grid_spec=pltpu.PrefetchScalarGridSpec(
                num_scalar_prefetch=0,
                grid=(G,),
                in_specs=[
                    pl.BlockSpec((w_rows, 128), lambda g: (0, 0)),      # weights stay resident
                    pl.BlockSpec((ACT_ROWS, 128), lambda g: (g, 0)),    # per-batch activations
                ],
                out_specs=pl.BlockSpec((OUT_ROWS, OUT_LANES), lambda g: (g, 0))),
            compiler_params=pltpu.CompilerParams(
                dimension_semantics=("parallel",)),                     # shard over v7x TCs
        )(slab, act)
        out = out.reshape(G, OUT_ROWS, OUT_LANES)

        theta = out[:, 0:B, 0:K]
        loss = out[:, B, 0]
        outputs = {'loss': loss,
                   'recon_word': out[:, B, 1],
                   'KL1': out[:, B, 2],
                   'KL2': out[:, B, 3],
                   'recon_structure': jnp.zeros_like(loss)}
        return outputs, theta, loss

    def forward(idx_x, idx_w, x_batch, edge_index, edge_w, doc_input, epoch=0):
        """Eval-mode forward.  Inputs may carry an optional leading axis of G
        independent mini-batches; all G are processed by one fused launch."""
        # TODO(synk): only the eval-mode, epoch < args.train_topic branch is implemented
        # (no dropout / reparameterization noise / batch-stat BatchNorm; the structure
        # branch with adj_mask python loop, edge_id_batch scatters and phi @ phi.T
        # negative sampling is not implemented).
        del epoch
        batched = doc_input.ndim == 3
        if not batched:
            idx_x, idx_w, x_batch = idx_x[None], idx_w[None], x_batch[None]
            edge_index, edge_w, doc_input = edge_index[None], edge_w[None], doc_input[None]
        outputs, theta, loss = _forward_batched(idx_x, idx_w, x_batch,
                                                edge_index, edge_w, doc_input)
        if not batched:
            outputs = jax.tree_util.tree_map(lambda a: a[0], outputs)
            theta, loss = theta[0], loss[0]
        return outputs, theta, loss

    return forward


# --------------------------------------------------------------------------
# Parameter init (PyTorch-layout weights, then packed by pack_params)
# --------------------------------------------------------------------------
def init_params(key):
    ks = jax.random.split(key, 18)

    def nrm(k, shape, s=0.1):
        return (jax.random.normal(k, shape) * s).astype(jnp.float32)

    p = {}
    p['word_vec'] = nrm(ks[0], (V, NI), 0.1)
    # --- graph encoder ---
    p['gnn_wrel'] = nrm(ks[1], (NW, NI))          # GraphConv lin_rel (has bias)
    p['gnn_brel'] = jnp.zeros((1, NW), jnp.float32)
    p['gnn_wroot'] = nrm(ks[2], (NW, NI))         # GraphConv lin_root (no bias)
    p['enc2_fc1_w'] = nrm(ks[3], (H, NW + NI))    # applied to [enc1 | x]
    p['enc2_fc1_b'] = nrm(ks[4], (1, H), 0.01)
    p['enc2_fc2_w'] = nrm(ks[5], (H, NW + NI))
    p['enc2_fc2_b'] = nrm(ks[6], (1, H), 0.01)
    p['ge_mean_w'] = nrm(ks[7], (K, H))
    p['ge_mean_b'] = nrm(ks[8], (1, K), 0.01)
    p['ge_logvar_w'] = jnp.zeros((K, H), jnp.float32)   # zero-init per reset_parameters
    p['ge_logvar_b'] = jnp.zeros((1, K), jnp.float32)
    # --- GSM head ---
    p['enc1_fc_w'] = nrm(ks[9], (2 * H, V))
    p['enc1_fc_b'] = nrm(ks[10], (1, 2 * H), 0.01)
    p['enc2_fc_w'] = nrm(ks[11], (H, 2 * H))
    p['enc2_fc_b'] = nrm(ks[12], (1, H), 0.01)
    p['mean_fc_w'] = nrm(ks[13], (K, H))
    p['mean_fc_b'] = nrm(ks[14], (1, K), 0.01)
    p['logvar_fc_w'] = jnp.zeros((K, H), jnp.float32)   # zero-init per reset_parameters
    p['logvar_fc_b'] = jnp.zeros((1, K), jnp.float32)
    p['decoder_w'] = jax.random.uniform(ks[15], (K, K), minval=0.0, maxval=0.1).astype(jnp.float32)
    p['decoder_b'] = nrm(ks[16], (1, K), 0.01)
    p['topic_vec'] = jax.random.normal(ks[17], (K, NI)).astype(jnp.float32)
    return p


if __name__ == "__main__":
    key = jax.random.PRNGKey(0)
    pk, dk = jax.random.split(key)
    params = init_params(pk)
    gsm_forward = build_gsm_forward(params)

    G = 4                                                                     # mini-batches per launch
    d = jax.random.split(dk, 6)
    idx_x = jax.random.randint(d[0], (G, N_NODES), 0, V)                      # word id per node
    idx_w = jax.random.uniform(d[1], (G, N_NODES), minval=0.5, maxval=2.0)    # word weight per node
    x_batch = jnp.tile(jnp.repeat(jnp.arange(B, dtype=jnp.int32), N_NODES // B), (G, 1))
    src = jax.random.randint(d[2], (G, E), 0, N_NODES)
    dst = jax.random.randint(d[3], (G, E), 0, N_NODES)
    edge_index = jnp.stack([src, dst], axis=1).astype(jnp.int32)              # (G, 2, E)
    edge_w = jax.random.uniform(d[4], (G, E), minval=0.1, maxval=1.0)
    doc_input = jax.random.uniform(d[5], (G, B, V), minval=0.0, maxval=3.0)   # document BOW

    outputs, theta, topic_loss = gsm_forward(
        idx_x, idx_w, x_batch, edge_index, edge_w, doc_input, epoch=0)
    jax.block_until_ready((outputs, theta, topic_loss))
    assert theta.shape == (G, B, K) and topic_loss.shape == (G,)
    print("KERNEL_OK")
</pallas_src>

<mosaic_0001>
module attributes {stable_mosaic.version = 11 : i64} {
  func.func @fused_kernel(%arg0: i32, %arg1: memref<152x128xf32, #tpu.memory_space<vmem>>, %arg2: memref<40x128xf32, #tpu.memory_space<vmem>>, %arg3: memref<8x128xf32, #tpu.memory_space<vmem>>) attributes {dimension_semantics = [#tpu.dimension_semantics<parallel>], iteration_bounds = array<i64: 4>, scalar_prefetch = 0 : i64, scratch_operands = 0 : i64, tpu.core_type = #tpu.core_type<tc>, window_params = [{pipeline_mode = #tpu.pipeline_mode<synchronous>, transform_indices = @transform_0, window_bounds = array<i64: 152, 128>}, {transform_indices = @transform_1, window_bounds = array<i64: 40, 128>}, {transform_indices = @transform_2, window_bounds = array<i64: 8, 128>}]} {
    %c0 = arith.constant 0 : index
    %c0_0 = arith.constant 0 : index
    %0 = vector.load %arg2[%c0, %c0_0] : memref<40x128xf32, #tpu.memory_space<vmem>>, vector<2x32xf32>
    %c2 = arith.constant 2 : index
    %c0_1 = arith.constant 0 : index
    %1 = vector.load %arg2[%c2, %c0_1] : memref<40x128xf32, #tpu.memory_space<vmem>>, vector<1x16xf32>
    %c3 = arith.constant 3 : index
    %c0_2 = arith.constant 0 : index
    %2 = vector.load %arg2[%c3, %c0_2] : memref<40x128xf32, #tpu.memory_space<vmem>>, vector<1x12xf32>
    %c4 = arith.constant 4 : index
    %c0_3 = arith.constant 0 : index
    %3 = vector.load %arg2[%c4, %c0_3] : memref<40x128xf32, #tpu.memory_space<vmem>>, vector<1x16xf32>
    %4 = arith.fptosi %3 : vector<1x16xf32> to vector<1x16xi32>
    %c5 = arith.constant 5 : index
    %c0_4 = arith.constant 0 : index
    %5 = vector.load %arg2[%c5, %c0_4] : memref<40x128xf32, #tpu.memory_space<vmem>>, vector<1x12xf32>
    %6 = arith.fptosi %5 : vector<1x12xf32> to vector<1x12xi32>
    %c8 = arith.constant 8 : index
    %c0_5 = arith.constant 0 : index
    %7 = vector.load %arg2[%c8, %c0_5] : memref<40x128xf32, #tpu.memory_space<vmem>>, vector<16x1xf32>
    %8 = arith.fptosi %7 : vector<16x1xf32> to vector<16x1xi32>
    %c24 = arith.constant 24 : index
    %c0_6 = arith.constant 0 : index
    %9 = vector.load %arg2[%c24, %c0_6] : memref<40x128xf32, #tpu.memory_space<vmem>>, vector<12x1xf32>
    %10 = arith.fptosi %9 : vector<12x1xf32> to vector<12x1xi32>
    %11 = tpu.iota {dimensions = array<i32: 1>} : vector<16x32xi32>
    %12 = vector.broadcast %8 : vector<16x1xi32> to vector<16x32xi32>
    %13 = arith.cmpi eq, %11, %12 : vector<16x32xi32>
    %14 = arith.extui %13 : vector<16x32xi1> to vector<16x32xi32>
    %15 = arith.sitofp %14 : vector<16x32xi32> to vector<16x32xf32>
    %c56 = arith.constant 56 : index
    %c96 = arith.constant 96 : index
    %16 = vector.load %arg1[%c56, %c96] : memref<152x128xf32, #tpu.memory_space<vmem>>, vector<32x16xf32>
    %cst = arith.constant dense<0.000000e+00> : vector<16x16xf32>
    %17 = tpu.matmul %15, %16, %cst {dimension_numbers = #tpu.dot_dimension_numbers<[1], [0], [0], [1], [0, 0, 1, 1], [], []>} : vector<16x32xf32>, vector<32x16xf32>, vector<16x16xf32> -> vector<16x16xf32>
    %18 = tpu.iota {dimensions = array<i32: 0>} : vector<16x12xi32>
    %19 = vector.broadcast %6 : vector<1x12xi32> to vector<16x12xi32>
    %20 = arith.cmpi eq, %18, %19 : vector<16x12xi32>
    %21 = arith.extui %20 : vector<16x12xi1> to vector<16x12xi32>
    %22 = arith.sitofp %21 : vector<16x12xi32> to vector<16x12xf32>
    %23 = tpu.iota {dimensions = array<i32: 1>} : vector<12x16xi32>
    %24 = vector.broadcast %10 : vector<12x1xi32> to vector<12x16xi32>
    %25 = arith.cmpi eq, %23, %24 : vector<12x16xi32>
    %26 = arith.extui %25 : vector<12x16xi1> to vector<12x16xi32>
    %27 = arith.sitofp %26 : vector<12x16xi32> to vector<12x16xf32>
    %28 = vector.broadcast %2 : vector<1x12xf32> to vector<16x12xf32>
    %29 = arith.mulf %22, %28 : vector<16x12xf32>
    %cst_7 = arith.constant dense<0.000000e+00> : vector<16x16xf32>
    %30 = tpu.matmul %29, %27, %cst_7 {dimension_numbers = #tpu.dot_dimension_numbers<[1], [0], [0], [1], [0, 0, 1, 1], [], []>} : vector<16x12xf32>, vector<12x16xf32>, vector<16x16xf32> -> vector<16x16xf32>
    %31 = tpu.iota {dimensions = array<i32: 0>} : vector<16x16xi32>
    %32 = tpu.iota {dimensions = array<i32: 1>} : vector<16x16xi32>
    %33 = arith.cmpi eq, %31, %32 : vector<16x16xi32>
    %34 = arith.extui %33 : vector<16x16xi1> to vector<16x16xi32>
    %35 = arith.sitofp %34 : vector<16x16xi32> to vector<16x16xf32>
    %36 = vector.broadcast %1 : vector<1x16xf32> to vector<16x16xf32>
    %37 = arith.mulf %35, %36 : vector<16x16xf32>
    %38 = arith.addf %30, %37 : vector<16x16xf32>
    %39 = tpu.iota {dimensions = array<i32: 0>} : vector<2x16xi32>
    %40 = vector.broadcast %4 : vector<1x16xi32> to vector<2x16xi32>
    %41 = arith.cmpi eq, %39, %40 : vector<2x16xi32>
    %42 = arith.extui %41 : vector<2x16xi1> to vector<2x16xi32>
    %43 = arith.sitofp %42 : vector<2x16xi32> to vector<2x16xf32>
    %cst_8 = arith.constant dense<0.000000e+00> : vector<16x16xf32>
    %44 = tpu.matmul %38, %17, %cst_8 {dimension_numbers = #tpu.dot_dimension_numbers<[1], [0], [0], [1], [0, 0, 1, 1], [], []>} : vector<16x16xf32>, vector<16x16xf32>, vector<16x16xf32> -> vector<16x16xf32>
    %c24_9 = arith.constant 24 : index
    %c0_10 = arith.constant 0 : index
    %45 = vector.load %arg1[%c24_9, %c0_10] : memref<152x128xf32, #tpu.memory_space<vmem>>, vector<16x16xf32>
    %cst_11 = arith.constant dense<0.000000e+00> : vector<16x16xf32>
    %46 = tpu.matmul %44, %45, %cst_11 {dimension_numbers = #tpu.dot_dimension_numbers<[1], [0], [0], [1], [0, 0, 1, 1], [], []>} : vector<16x16xf32>, vector<16x16xf32>, vector<16x16xf32> -> vector<16x16xf32>
    %c24_12 = arith.constant 24 : index
    %c16 = arith.constant 16 : index
    %47 = vector.load %arg1[%c24_12, %c16] : memref<152x128xf32, #tpu.memory_space<vmem>>, vector<16x16xf32>
    %cst_13 = arith.constant dense<0.000000e+00> : vector<16x16xf32>
    %48 = tpu.matmul %17, %47, %cst_13 {dimension_numbers = #tpu.dot_dimension_numbers<[1], [0], [0], [1], [0, 0, 1, 1], [], []>} : vector<16x16xf32>, vector<16x16xf32>, vector<16x16xf32> -> vector<16x16xf32>
    %49 = arith.addf %46, %48 : vector<16x16xf32>
    %c0_14 = arith.constant 0 : index
    %c0_15 = arith.constant 0 : index
    %50 = vector.load %arg1[%c0_14, %c0_15] : memref<152x128xf32, #tpu.memory_space<vmem>>, vector<1x16xf32>
    %51 = vector.broadcast %50 : vector<1x16xf32> to vector<16x16xf32>
    %52 = arith.addf %49, %51 : vector<16x16xf32>
    %cst_16 = arith.constant 0.999994993 : f32
    %53 = vector.broadcast %cst_16 : f32 to vector<16x16xf32>
    %54 = arith.mulf %52, %53 : vector<16x16xf32>
    %55 = math.tanh %54 : vector<16x16xf32>
    %c24_17 = arith.constant 24 : index
    %c32 = arith.constant 32 : index
    %56 = vector.load %arg1[%c24_17, %c32] : memref<152x128xf32, #tpu.memory_space<vmem>>, vector<16x32xf32>
    %cst_18 = arith.constant dense<0.000000e+00> : vector<16x32xf32>
    %57 = tpu.matmul %55, %56, %cst_18 {dimension_numbers = #tpu.dot_dimension_numbers<[1], [0], [0], [1], [0, 0, 1, 1], [], []>} : vector<16x16xf32>, vector<16x32xf32>, vector<16x32xf32> -> vector<16x32xf32>
    %c24_19 = arith.constant 24 : index
    %c64 = arith.constant 64 : index
    %58 = vector.load %arg1[%c24_19, %c64] : memref<152x128xf32, #tpu.memory_space<vmem>>, vector<16x32xf32>
    %cst_20 = arith.constant dense<0.000000e+00> : vector<16x32xf32>
    %59 = tpu.matmul %17, %58, %cst_20 {dimension_numbers = #tpu.dot_dimension_numbers<[1], [0], [0], [1], [0, 0, 1, 1], [], []>} : vector<16x16xf32>, vector<16x32xf32>, vector<16x32xf32> -> vector<16x32xf32>
    %60 = arith.addf %57, %59 : vector<16x32xf32>
    %c0_21 = arith.constant 0 : index
    %c16_22 = arith.constant 16 : index
    %61 = vector.load %arg1[%c0_21, %c16_22] : memref<152x128xf32, #tpu.memory_space<vmem>>, vector<1x32xf32>
    %62 = vector.broadcast %61 : vector<1x32xf32> to vector<16x32xf32>
    %63 = arith.addf %60, %62 : vector<16x32xf32>
    %c24_23 = arith.constant 24 : index
    %c96_24 = arith.constant 96 : index
    %64 = vector.load %arg1[%c24_23, %c96_24] : memref<152x128xf32, #tpu.memory_space<vmem>>, vector<16x32xf32>
    %cst_25 = arith.constant dense<0.000000e+00> : vector<16x32xf32>
    %65 = tpu.matmul %55, %64, %cst_25 {dimension_numbers = #tpu.dot_dimension_numbers<[1], [0], [0], [1], [0, 0, 1, 1], [], []>} : vector<16x16xf32>, vector<16x32xf32>, vector<16x32xf32> -> vector<16x32xf32>
    %c40 = arith.constant 40 : index
    %c0_26 = arith.constant 0 : index
    %66 = vector.load %arg1[%c40, %c0_26] : memref<152x128xf32, #tpu.memory_space<vmem>>, vector<16x32xf32>
    %cst_27 = arith.constant dense<0.000000e+00> : vector<16x32xf32>
    %67 = tpu.matmul %17, %66, %cst_27 {dimension_numbers = #tpu.dot_dimension_numbers<[1], [0], [0], [1], [0, 0, 1, 1], [], []>} : vector<16x16xf32>, vector<16x32xf32>, vector<16x32xf32> -> vector<16x32xf32>
    %68 = arith.addf %65, %67 : vector<16x32xf32>
    %c0_28 = arith.constant 0 : index
    %c48 = arith.constant 48 : index
    %69 = vector.load %arg1[%c0_28, %c48] : memref<152x128xf32, #tpu.memory_space<vmem>>, vector<1x32xf32>
    %70 = vector.broadcast %69 : vector<1x32xf32> to vector<16x32xf32>
    %71 = arith.addf %68, %70 : vector<16x32xf32>
    %72 = arith.negf %63 : vector<16x32xf32>
    %73 = math.exp %72 : vector<16x32xf32>
    %cst_29 = arith.constant 1.000000e+00 : f32
    %74 = vector.broadcast %cst_29 : f32 to vector<16x32xf32>
    %75 = arith.addf %74, %73 : vector<16x32xf32>
    %76 = arith.divf %74, %75 : vector<16x32xf32>
    %77 = math.tanh %71 : vector<16x32xf32>
    %78 = arith.mulf %76, %77 : vector<16x32xf32>
    %cst_30 = arith.constant dense<0.000000e+00> : vector<2x32xf32>
    %79 = tpu.matmul %43, %78, %cst_30 {dimension_numbers = #tpu.dot_dimension_numbers<[1], [0], [0], [1], [0, 0, 1, 1], [], []>} : vector<2x16xf32>, vector<16x32xf32>, vector<2x32xf32> -> vector<2x32xf32>
    %c56_31 = arith.constant 56 : index
    %c0_32 = arith.constant 0 : index
    %80 = vector.load %arg1[%c56_31, %c0_32] : memref<152x128xf32, #tpu.memory_space<vmem>>, vector<32x8xf32>
    %cst_33 = arith.constant dense<0.000000e+00> : vector<2x8xf32>
    %81 = tpu.matmul %79, %80, %cst_33 {dimension_numbers = #tpu.dot_dimension_numbers<[1], [0], [0], [1], [0, 0, 1, 1], [], []>} : vector<2x32xf32>, vector<32x8xf32>, vector<2x8xf32> -> vector<2x8xf32>
    %c0_34 = arith.constant 0 : index
    %c80 = arith.constant 80 : index
    %82 = vector.load %arg1[%c0_34, %c80] : memref<152x128xf32, #tpu.memory_space<vmem>>, vector<1x8xf32>
    %83 = vector.broadcast %82 : vector<1x8xf32> to vector<2x8xf32>
    %84 = arith.addf %81, %83 : vector<2x8xf32>
    %cst_35 = arith.constant 0.999994993 : f32
    %85 = vector.broadcast %cst_35 : f32 to vector<2x8xf32>
    %86 = arith.mulf %84, %85 : vector<2x8xf32>
    %c56_36 = arith.constant 56 : index
    %c8_37 = arith.constant 8 : index
    %87 = vector.load %arg1[%c56_36, %c8_37] : memref<152x128xf32, #tpu.memory_space<vmem>>, vector<32x8xf32>
    %cst_38 = arith.constant dense<0.000000e+00> : vector<2x8xf32>
    %88 = tpu.matmul %79, %87, %cst_38 {dimension_numbers = #tpu.dot_dimension_numbers<[1], [0], [0], [1], [0, 0, 1, 1], [], []>} : vector<2x32xf32>, vector<32x8xf32>, vector<2x8xf32> -> vector<2x8xf32>
    %c0_39 = arith.constant 0 : index
    %c88 = arith.constant 88 : index
    %89 = vector.load %arg1[%c0_39, %c88] : memref<152x128xf32, #tpu.memory_space<vmem>>, vector<1x8xf32>
    %90 = vector.broadcast %89 : vector<1x8xf32> to vector<2x8xf32>
    %91 = arith.addf %88, %90 : vector<2x8xf32>
    %c56_40 = arith.constant 56 : index
    %c16_41 = arith.constant 16 : index
    %92 = vector.load %arg1[%c56_40, %c16_41] : memref<152x128xf32, #tpu.memory_space<vmem>>, vector<32x64xf32>
    %cst_42 = arith.constant dense<0.000000e+00> : vector<2x64xf32>
    %93 = tpu.matmul %0, %92, %cst_42 {dimension_numbers = #tpu.dot_dimension_numbers<[1], [0], [0], [1], [0, 0, 1, 1], [], []>} : vector<2x32xf32>, vector<32x64xf32>, vector<2x64xf32> -> vector<2x64xf32>
    %c8_43 = arith.constant 8 : index
    %c0_44 = arith.constant 0 : index
    %94 = vector.load %arg1[%c8_43, %c0_44] : memref<152x128xf32, #tpu.memory_space<vmem>>, vector<1x64xf32>
    %95 = vector.broadcast %94 : vector<1x64xf32> to vector<2x64xf32>
    %96 = arith.addf %93, %95 : vector<2x64xf32>
    %97 = math.tanh %96 : vector<2x64xf32>
    %c88_45 = arith.constant 88 : index
    %c0_46 = arith.constant 0 : index
    %98 = vector.load %arg1[%c88_45, %c0_46] : memref<152x128xf32, #tpu.memory_space<vmem>>, vector<64x32xf32>
    %cst_47 = arith.constant dense<0.000000e+00> : vector<2x32xf32>
    %99 = tpu.matmul %97, %98, %cst_47 {dimension_numbers = #tpu.dot_dimension_numbers<[1], [0], [0], [1], [0, 0, 1, 1], [], []>} : vector<2x64xf32>, vector<64x32xf32>, vector<2x32xf32> -> vector<2x32xf32>
    %c8_48 = arith.constant 8 : index
    %c64_49 = arith.constant 64 : index
    %100 = vector.load %arg1[%c8_48, %c64_49] : memref<152x128xf32, #tpu.memory_space<vmem>>, vector<1x32xf32>
    %101 = vector.broadcast %100 : vector<1x32xf32> to vector<2x32xf32>
    %102 = arith.addf %99, %101 : vector<2x32xf32>
    %103 = math.tanh %102 : vector<2x32xf32>
    %c56_50 = arith.constant 56 : index
    %c80_51 = arith.constant 80 : index
    %104 = vector.load %arg1[%c56_50, %c80_51] : memref<152x128xf32, #tpu.memory_space<vmem>>, vector<32x8xf32>
    %cst_52 = arith.constant dense<0.000000e+00> : vector<2x8xf32>
    %105 = tpu.matmul %103, %104, %cst_52 {dimension_numbers = #tpu.dot_dimension_numbers<[1], [0], [0], [1], [0, 0, 1, 1], [], []>} : vector<2x32xf32>, vector<32x8xf32>, vector<2x8xf32> -> vector<2x8xf32>
    %c8_53 = arith.constant 8 : index
    %c96_54 = arith.constant 96 : index
    %106 = vector.load %arg1[%c8_53, %c96_54] : memref<152x128xf32, #tpu.memory_space<vmem>>, vector<1x8xf32>
    %107 = vector.broadcast %106 : vector<1x8xf32> to vector<2x8xf32>
    %108 = arith.addf %105, %107 : vector<2x8xf32>
    %c56_55 = arith.constant 56 : index
    %c88_56 = arith.constant 88 : index
    %109 = vector.load %arg1[%c56_55, %c88_56] : memref<152x128xf32, #tpu.memory_space<vmem>>, vector<32x8xf32>
    %cst_57 = arith.constant dense<0.000000e+00> : vector<2x8xf32>
    %110 = tpu.matmul %103, %109, %cst_57 {dimension_numbers = #tpu.dot_dimension_numbers<[1], [0], [0], [1], [0, 0, 1, 1], [], []>} : vector<2x32xf32>, vector<32x8xf32>, vector<2x8xf32> -> vector<2x8xf32>
    %c8_58 = arith.constant 8 : index
    %c104 = arith.constant 104 : index
    %111 = vector.load %arg1[%c8_58, %c104] : memref<152x128xf32, #tpu.memory_space<vmem>>, vector<1x8xf32>
    %112 = vector.broadcast %111 : vector<1x8xf32> to vector<2x8xf32>
    %113 = arith.addf %110, %112 : vector<2x8xf32>
    %c8_59 = arith.constant 8 : index
    %c112 = arith.constant 112 : index
    %114 = vector.load %arg1[%c8_59, %c112] : memref<152x128xf32, #tpu.memory_space<vmem>>, vector<8x8xf32>
    %cst_60 = arith.constant dense<0.000000e+00> : vector<2x8xf32>
    %115 = tpu.matmul %108, %114, %cst_60 {dimension_numbers = #tpu.dot_dimension_numbers<[1], [0], [0], [1], [0, 0, 1, 1], [], []>} : vector<2x8xf32>, vector<8x8xf32>, vector<2x8xf32> -> vector<2x8xf32>
    %c8_61 = arith.constant 8 : index
    %c120 = arith.constant 120 : index
    %116 = vector.load %arg1[%c8_61, %c120] : memref<152x128xf32, #tpu.memory_space<vmem>>, vector<1x8xf32>
    %117 = vector.broadcast %116 : vector<1x8xf32> to vector<2x8xf32>
    %118 = arith.addf %115, %117 : vector<2x8xf32>
    %cst_62 = arith.constant dense<0xFF800000> : vector<2xf32>
    %119 = vector.multi_reduction <maximumf>, %118, %cst_62 [1] : vector<2x8xf32> to vector<2xf32>
    %120 = vector.shape_cast %119 : vector<2xf32> to vector<2x1xf32>
    %121 = vector.broadcast %120 : vector<2x1xf32> to vector<2x8xf32>
    %122 = arith.subf %118, %121 : vector<2x8xf32>
    %123 = math.exp %122 : vector<2x8xf32>
    %cst_63 = arith.constant dense<0.000000e+00> : vector<2xf32>
    %124 = vector.multi_reduction <add>, %123, %cst_63 [1] : vector<2x8xf32> to vector<2xf32>
    %125 = vector.shape_cast %124 : vector<2xf32> to vector<2x1xf32>
    %126 = vector.broadcast %125 : vector<2x1xf32> to vector<2x8xf32>
    %127 = arith.divf %123, %126 : vector<2x8xf32>
    %c16_64 = arith.constant 16 : index
    %c0_65 = arith.constant 0 : index
    %128 = vector.load %arg1[%c16_64, %c0_65] : memref<152x128xf32, #tpu.memory_space<vmem>>, vector<8x32xf32>
    %cst_66 = arith.constant dense<0.000000e+00> : vector<2x32xf32>
    %129 = tpu.matmul %127, %128, %cst_66 {dimension_numbers = #tpu.dot_dimension_numbers<[1], [0], [0], [1], [0, 0, 1, 1], [], []>} : vector<2x8xf32>, vector<8x32xf32>, vector<2x32xf32> -> vector<2x32xf32>
    %cst_67 = arith.constant 1.000000e-10 : f32
    %130 = vector.broadcast %cst_67 : f32 to vector<2x32xf32>
    %131 = arith.addf %129, %130 : vector<2x32xf32>
    %132 = math.log %131 : vector<2x32xf32>
    %133 = arith.mulf %0, %132 : vector<2x32xf32>
    %cst_68 = arith.constant dense<0.000000e+00> : vector<2xf32>
    %134 = vector.multi_reduction <add>, %133, %cst_68 [1] : vector<2x32xf32> to vector<2xf32>
    %135 = vector.shape_cast %134 : vector<2xf32> to vector<2x1xf32>
    %cst_69 = arith.constant 0.000000e+00 : f32
    %136 = vector.broadcast %cst_69 : f32 to vector<2x1xf32>
    %137 = arith.subf %136, %135 : vector<2x1xf32>
    %138 = math.exp %91 : vector<2x8xf32>
    %139 = math.exp %113 : vector<2x8xf32>
    %140 = arith.subf %113, %91 : vector<2x8xf32>
    %141 = arith.subf %86, %108 : vector<2x8xf32>
    %142 = arith.mulf %141, %141 : vector<2x8xf32>
    %143 = arith.addf %138, %142 : vector<2x8xf32>
    %144 = arith.divf %143, %139 : vector<2x8xf32>
    %145 = arith.addf %140, %144 : vector<2x8xf32>
    %cst_70 = arith.constant 1.000000e+00 : f32
    %146 = vector.broadcast %cst_70 : f32 to vector<2x8xf32>
    %147 = arith.subf %145, %146 : vector<2x8xf32>
    %cst_71 = arith.constant dense<0.000000e+00> : vector<2xf32>
    %148 = vector.multi_reduction <add>, %147, %cst_71 [1] : vector<2x8xf32> to vector<2xf32>
    %149 = vector.shape_cast %148 : vector<2xf32> to vector<2x1xf32>
    %cst_72 = arith.constant 5.000000e-01 : f32
    %150 = vector.broadcast %cst_72 : f32 to vector<2x1xf32>
    %151 = arith.mulf %150, %149 : vector<2x1xf32>
    %152 = arith.mulf %86, %86 : vector<2x8xf32>
    %cst_73 = arith.constant 1.000000e+00 : f32
    %153 = vector.broadcast %cst_73 : f32 to vector<2x8xf32>
    %154 = arith.subf %153, %152 : vector<2x8xf32>
    %155 = arith.addf %154, %91 : vector<2x8xf32>
    %156 = arith.subf %155, %138 : vector<2x8xf32>
    %cst_74 = arith.constant dense<0.000000e+00> : vector<2xf32>
    %157 = vector.multi_reduction <add>, %156, %cst_74 [1] : vector<2x8xf32> to vector<2xf32>
    %158 = vector.shape_cast %157 : vector<2xf32> to vector<2x1xf32>
    %cst_75 = arith.constant -5.000000e-01 : f32
    %159 = vector.broadcast %cst_75 : f32 to vector<2x1xf32>
    %160 = arith.mulf %159, %158 : vector<2x1xf32>
    %161 = arith.addf %137, %151 : vector<2x1xf32>
    %162 = arith.addf %161, %160 : vector<2x1xf32>
    %cst_76 = arith.constant dense<0.000000e+00> : vector<1xf32>
    %163 = vector.multi_reduction <add>, %162, %cst_76 [0] : vector<2x1xf32> to vector<1xf32>
    %164 = vector.shape_cast %163 : vector<1xf32> to vector<1x1xf32>
    %cst_77 = arith.constant 5.000000e-01 : f32
    %165 = vector.broadcast %cst_77 : f32 to vector<1x1xf32>
    %166 = arith.mulf %164, %165 : vector<1x1xf32>
    %cst_78 = arith.constant dense<0.000000e+00> : vector<1xf32>
    %167 = vector.multi_reduction <add>, %137, %cst_78 [0] : vector<2x1xf32> to vector<1xf32>
    %168 = vector.shape_cast %167 : vector<1xf32> to vector<1x1xf32>
    %cst_79 = arith.constant 5.000000e-01 : f32
    %169 = vector.broadcast %cst_79 : f32 to vector<1x1xf32>
    %170 = arith.mulf %168, %169 : vector<1x1xf32>
    %cst_80 = arith.constant dense<0.000000e+00> : vector<1xf32>
    %171 = vector.multi_reduction <add>, %151, %cst_80 [0] : vector<2x1xf32> to vector<1xf32>
    %172 = vector.shape_cast %171 : vector<1xf32> to vector<1x1xf32>
    %cst_81 = arith.constant 5.000000e-01 : f32
    %173 = vector.broadcast %cst_81 : f32 to vector<1x1xf32>
    %174 = arith.mulf %172, %173 : vector<1x1xf32>
    %cst_82 = arith.constant dense<0.000000e+00> : vector<1xf32>
    %175 = vector.multi_reduction <add>, %160, %cst_82 [0] : vector<2x1xf32> to vector<1xf32>
    %176 = vector.shape_cast %175 : vector<1xf32> to vector<1x1xf32>
    %cst_83 = arith.constant 5.000000e-01 : f32
    %177 = vector.broadcast %cst_83 : f32 to vector<1x1xf32>
    %178 = arith.mulf %176, %177 : vector<1x1xf32>
    %cst_84 = arith.constant 0.000000e+00 : f32
    %179 = vector.broadcast %cst_84 : f32 to vector<2x117xf32>
    %180 = tpu.concatenate %127, %137, %151, %160, %179 in 1 : vector<2x8xf32>, vector<2x1xf32>, vector<2x1xf32>, vector<2x1xf32>, vector<2x117xf32> -> vector<2x128xf32>
    %cst_85 = arith.constant 0.000000e+00 : f32
    %181 = vector.broadcast %cst_85 : f32 to vector<1x124xf32>
    %182 = tpu.concatenate %166, %170, %174, %178, %181 in 1 : vector<1x1xf32>, vector<1x1xf32>, vector<1x1xf32>, vector<1x1xf32>, vector<1x124xf32> -> vector<1x128xf32>
    %cst_86 = arith.constant 0.000000e+00 : f32
    %183 = vector.broadcast %cst_86 : f32 to vector<5x128xf32>
    %184 = tpu.concatenate %180, %182, %183 in 0 : vector<2x128xf32>, vector<1x128xf32>, vector<5x128xf32> -> vector<8x128xf32>
    %c0_87 = arith.constant 0 : index
    %c0_88 = arith.constant 0 : index
    %185 = vector.load %arg3[%c0_87, %c0_88] : memref<8x128xf32, #tpu.memory_space<vmem>>, vector<8x128xf32>
    tpu.vector_store %arg3[%c0_87, %c0_88], %184 {strides = array<i32>} : memref<8x128xf32, #tpu.memory_space<vmem>>, vector<8x128xf32>,
    return
  }
  func.func @transform_0(%arg0: i32) -> (i32, i32) {
    %c0_i32 = arith.constant 0 : i32
    %c0_i32_0 = arith.constant 0 : i32
    %c0_i32_1 = arith.constant 0 : i32
    return %c0_i32, %c0_i32_0 : i32, i32
  }
  func.func @transform_1(%arg0: i32) -> (i32, i32) {
    %c0_i32 = arith.constant 0 : i32
    %c0_i32_0 = arith.constant 0 : i32
    return %arg0, %c0_i32 : i32, i32
  }
  func.func @transform_2(%arg0: i32) -> (i32, i32) {
    %c0_i32 = arith.constant 0 : i32
    %c0_i32_0 = arith.constant 0 : i32
    return %arg0, %c0_i32 : i32, i32
  }
}

</mosaic_0001>

<llo_original>
// kernel: _forward_batched.1
$region0: #{_forward_batched.1}
  #allocation0 [shape = 'u32[]', space=smem, size = 0x4, offset = 0x4, fixed_abs, tag = 'smem constant byte address 0x4 - core index']
  #allocation1 [shape = 'u32[72,128]{1,0:T(1,128)}', space=vmem, size = 0x9000, scoped, tag = 'internal scratch']
  %s0 = inlined_call_operand.vmem [shape: f32[152,128], index: 0, kind: input, shape index: {}]
  %s1 = inlined_call_operand.vmem [shape: f32[160,128], index: 1, kind: input, shape index: {}]
  %s2 = inlined_call_operand.vmem [shape: f32[32,128], index: 2, kind: output, shape index: {}]
  %s3 = sld [smem:[#allocation0]]
  $region41: #{_forward_batched.1} parent=0
    _
  %s5 = ssub.s32 1, %s3
  %s6 = scalar_select 0, %s5, %s3
  loop: start=0, step=1, limit=6
  $region2: #{_forward_batched.1} parent=0 // loop_pre_header
    _
  $region3: #{_forward_batched.1} parent=0 // loop_header
    %s8 = sphi 0, %s12
    %p9 = scmp.ge.s32.totalorder %s8, 6
    %s16 = sphi 0, %s16
    %s18 = sphi 0, %s16
    %s19 = sphi 0, %s18
    %s33 = sphi 0, %s19
    %s39 = sphi 0, %s41
    %s42 = sphi 0, %s39
    %s43 = sphi 0, %s42
    %s59 = sphi 0, %s43
    %s65 = sphi 0, %s67
    %s68 = sphi 0, %s65
    %s69 = sphi 0, %s68
    %s85 = sphi 0, %s69
  $region4: #{_forward_batched.1} parent=0 // loop_header_branch
    %11 = sbr.rel (%p9) target = $region8
  $region5: #{_forward_batched.1} parent=0 // loop_body
    %s13 = ssub.s32 %s8, 1
    %s14 = ssub.s32 %s8, 2
    %s15 = sadd.s32 %s8, 1
    %s17 = sadd.s32 %s16, 1
    %p20 = scmp.eq.s32.totalorder %s8, 3
    %p21 = scmp.ne.s32.totalorder %s16, %s18
    %p22 = scmp.eq.s32.totalorder %s8, 0
    %p23 = por %p21, %p22
    %p24 = scmp.ne.s32.totalorder %s16, %s18
    %p25 = scmp.eq.s32.totalorder %s13, 3
    %p26 = por %p24, %p25
    %p27 = scmp.ne.s32.totalorder %s18, %s19
    %p28 = scmp.eq.s32.totalorder %s13, 0
    %p29 = por %p27, %p28
    %p30 = scmp.ne.s32.totalorder %s18, %s19
    %p31 = scmp.eq.s32.totalorder %s14, 3
    %p32 = por %p30, %p31
    %p34 = scmp.ne.s32.totalorder %s19, %s33
    %p35 = scmp.eq.s32.totalorder %s14, 0
    %p36 = por %p34, %p35
    %s37 = ssub.s32 %s8, %s15
    %p38 = scmp.eq.s32.totalorder %s37, 0
    %s40 = sadd.s32 %s39, 1
    %s41 = scalar_select %p38, %s39, %s40
    %p44 = pneg %p38
    %p45 = scmp.eq.s32.totalorder %s8, 3
    %p46 = por %p44, %p45
    %p47 = scmp.ne.s32.totalorder %s39, %s42
    %p48 = scmp.eq.s32.totalorder %s8, 0
    %p49 = por %p47, %p48
    %p50 = scmp.ne.s32.totalorder %s39, %s42
    %p51 = scmp.eq.s32.totalorder %s13, 3
    %p52 = por %p50, %p51
    %p53 = scmp.ne.s32.totalorder %s42, %s43
    %p54 = scmp.eq.s32.totalorder %s13, 0
    %p55 = por %p53, %p54
    %p56 = scmp.ne.s32.totalorder %s42, %s43
    %p57 = scmp.eq.s32.totalorder %s14, 3
    %p58 = por %p56, %p57
    %p60 = scmp.ne.s32.totalorder %s43, %s59
    %p61 = scmp.eq.s32.totalorder %s14, 0
    %p62 = por %p60, %p61
    %s63 = ssub.s32 %s8, %s15
    %p64 = scmp.eq.s32.totalorder %s63, 0
    %s66 = sadd.s32 %s65, 1
    %s67 = scalar_select %p64, %s65, %s66
    %p70 = pneg %p64
    %p71 = scmp.eq.s32.totalorder %s8, 3
    %p72 = por %p70, %p71
    %p73 = scmp.ne.s32.totalorder %s65, %s68
    %p74 = scmp.eq.s32.totalorder %s8, 0
    %p75 = por %p73, %p74
    %p76 = scmp.ne.s32.totalorder %s65, %s68
    %p77 = scmp.eq.s32.totalorder %s13, 3
    %p78 = por %p76, %p77
    %p79 = scmp.ne.s32.totalorder %s68, %s69
    %p80 = scmp.eq.s32.totalorder %s13, 0
    %p81 = por %p79, %p80
    %p82 = scmp.ne.s32.totalorder %s68, %s69
    %p83 = scmp.eq.s32.totalorder %s14, 3
    %p84 = por %p82, %p83
    %p86 = scmp.ne.s32.totalorder %s69, %s85
    %p87 = scmp.eq.s32.totalorder %s14, 0
    %p88 = por %p86, %p87
    %p89 = scmp.le.s32.totalorder 1, %s8
    %p90 = scmp.lt.s32.totalorder %s8, 5
    %p91 = pnand %p89, %p90
    %p92 = pneg %p91
    // Predicated region
    $region9: #{_forward_batched.1} parent=5 // pred_check
      _
    $region10: #{_forward_batched.1} parent=5 // pred_check_branch
      %94 = sbr.rel (%p91) target = $region12
    $region11: #{_forward_batched.1} parent=5 // pred_region
      %s95 = ssub.s32 %s8, 1
      // Predicated region
      $region13: #{_forward_batched.1} parent=11 // pred_check
        %p96 = pneg %p29
      $region14: #{_forward_batched.1} parent=11 // pred_check_branch
        %98 = sbr.rel (%p96) target = $region16
      $region15: #{_forward_batched.1} parent=11 // pred_region
        _
      $region16: #{_forward_batched.1} parent=11 // pred_fallthru
        _
    $region12: #{_forward_batched.1} parent=5 // pred_fallthru
      _
    %p99 = scmp.lt.s32.totalorder %s8, 4
    // Predicated region
    $region17: #{_forward_batched.1} parent=5 // pred_check
      %p100 = pneg %p99
    $region18: #{_forward_batched.1} parent=5 // pred_check_branch
      %102 = sbr.rel (%p100) target = $region20
    $region19: #{_forward_batched.1} parent=5 // pred_region
      // Predicated region
      $region21: #{_forward_batched.1} parent=19 // pred_check
        %p103 = pneg %p49
      $region22: #{_forward_batched.1} parent=19 // pred_check_branch
        %105 = sbr.rel (%p103) target = $region24
      $region23: #{_forward_batched.1} parent=19 // pred_region
        %s106 = smul.u32 5, %s8
        %p107 = scmp.lt.s32.totalorder %s106, 19
        %s108 = scalar_select %p107, %s106, 19
        %s109 = smul.addr %s108, 8
        %s110 = scalar_lea.vmem %s1, %s109
        %s111 = smul.u32 5, %s8
      $region24: #{_forward_batched.1} parent=19 // pred_fallthru
        _
    $region20: #{_forward_batched.1} parent=5 // pred_fallthru
      _
    %p112 = scmp.le.s32.totalorder 1, %s8
    %p113 = scmp.lt.s32.totalorder %s8, 5
    %p114 = pnand %p112, %p113
    %p115 = pneg %p114
    // Predicated region
    $region25: #{_forward_batched.1} parent=5 // pred_check
      _
    $region26: #{_forward_batched.1} parent=5 // pred_check_branch
      %117 = sbr.rel (%p114) target = $region28
    $region27: #{_forward_batched.1} parent=5 // pred_region
      %s118 = ssub.s32 %s8, 1
      %p119 = pneg %p29
      %p120 = pneg %p26
      %s121 = smul.u32 5, %s13
      %p122 = scmp.lt.s32.totalorder %s121, 19
      %s123 = scalar_select %p122, %s121, 19
      %s124 = smul.addr %s123, 8
      %s125 = scalar_lea.vmem %s1, %s124
      %p126 = pneg %p55
      %p127 = pneg %p52
      %p128 = pneg %p81
      %p129 = pneg %p78
      %p130 = scmp.lt.s32.totalorder %s13, 3
      %s131 = scalar_select %p130, %s13, 3
      %s132 = smul.addr %s131, 8
      %s133 = scalar_lea.vmem %s2, %s132
      %s134 = smul.u32 5, %s13
      %p135 = scmp.lt.s32.totalorder %s134, 19
      %s136 = scalar_select %p135, %s134, 19
      %s137 = smul.addr %s136, 8
      %s138 = scalar_lea.vmem %s1, %s137
      %s139 = smul.u32 5, %s13
      %p140 = scmp.lt.s32.totalorder %s13, 3
      %s141 = scalar_select %p140, %s13, 3
      %s142 = smul.addr %s141, 8
      %s143 = scalar_lea.vmem %s2, %s142
      %v144 = vld [vmem:[%s138] sm:$0x3]
      %v145 = vld [vmem:[%s138 + $0x2] sm:$0x1]
      %v146 = vld [vmem:[%s138 + $0x3] sm:$0x1]
      %v147 = vld [vmem:[%s138 + $0x4] sm:$0x1]
      %v148 = vcvt.f32.s32.to.zero.pseudo %v147
      %v149 = vld [vmem:[%s138 + $0x5] sm:$0x1]
      %v150 = vcvt.f32.s32.to.zero.pseudo %v149
      %v151 = vld [vmem:[%s138 + $0x8] sm:$0xff]
      %v152 = vld [vmem:[%s138 + $0x10] sm:$0xff]
      %v153 = vcvt.f32.s32.to.zero.pseudo %v151
      %v154 = vcvt.f32.s32.to.zero.pseudo %v152
      %v155 = vld [vmem:[%s138 + $0x18] sm:$0xff]
      %v156 = vld [vmem:[%s138 + $0x20] sm:$0xf]
      %v157 = vcvt.f32.s32.to.zero.pseudo %v155
      %v158 = vcvt.f32.s32.to.zero.pseudo %v156
      %v159 = vlaneseq
      %v160 = vand.u32 %v159, 127
      %161 = vset.pattern.permute.xlu0 0
      %162 = vperm.xlu0 %161, %v153
      %v163 = vpop.permute.xlu0 %162
      %164 = vset.pattern.permute.xlu0 0
      %165 = vperm.xlu0 %164, %v154
      %v166 = vpop.permute.xlu0 %165
      %vm167 = vcmp.eq.s32.totalorder %v160, %v163
      %vm168 = vcmp.eq.s32.totalorder %v160, %v166
      %v169 = vsel %vm167, 1, 0
      %v170 = vsel %vm168, 1, 0
      %v171 = vcvt.s32.f32 %v169
      %v172 = vcvt.s32.f32 %v170
      %v173 = vld [vmem:[%s0 + $0x38] sm:$0xff]
      %v174 = vld [vmem:[%s0 + $0x40] sm:$0xff]
      %v175 = vld [vmem:[%s0 + $0x48] sm:$0xff]
      %v176 = vld [vmem:[%s0 + $0x50] sm:$0xff]
      %181 = vrot.lane.b32.xlu0 %v173, 32
      %v182 = vpop.permute.xlu0 %181
      %183 = vrot.lane.b32.xlu0 %v174, 32
      %v184 = vpop.permute.xlu0 %183
      %185 = vrot.lane.b32.xlu0 %v175, 32
      %v186 = vpop.permute.xlu0 %185
      %187 = vrot.lane.b32.xlu0 %v176, 32
      %v188 = vpop.permute.xlu0 %187
      %vm193 = vcmask 261120
      %v195 = vsel %vm193, %v171, 0
      %v198 = vsel %vm193, %v172, 0
      %200 = vmatpush.msra.mxu0 0.0
      %201 = vmatpush.msra.mxu0 0.0
      %202 = vmatpush.msra.mxu0 0.0
      %203 = vmatpush.msra.mxu0 0.0
      %204 = vmatpush.msra.mxu0 0.0
      %205 = vmatpush.msra.mxu0 0.0
      %206 = vmatpush.msra.mxu0 0.0
      %207 = vmatpush.msra.mxu0 0.0
      %208 = vmatpush.msra.mxu0 0.0
      %209 = vmatpush.msra.mxu0 0.0
      %210 = vmatpush.msra.mxu0 0.0
      %211 = vmatpush.msra.mxu0 0.0
      %212 = vmatpush.msra.mxu0 %v188
      %213 = vmatpush.msra.mxu0 %v186
      %214 = vmatpush.msra.mxu0 %v184
      %215 = vmatpush.msra.mxu0 %v182
      %216 = vmatmul.f32.gmra.mxu0 %v195
      %v217 = vpop.f32.mrf.mxu0
      %v218 = vadd.f32 0.0, %v217
      %219 = vmatmul.f32.gmra.mxu0 %v198
      %v220 = vpop.f32.mrf.mxu0
      %v221 = vadd.f32 0.0, %v220
      %222 = vdwg.mxu0
      %v223 = vlaneseq
      %v224 = vshrl.u32 %v223, 7
      %v225 = vadd.s32 %v224, 8
      %v226 = vperm.slane %v150, 0
      %vm227 = vcmp.eq.s32.totalorder %v224, %v226
      %vm228 = vcmp.eq.s32.totalorder %v225, %v226
      %v229 = vsel %vm227, 1, 0
      %v230 = vsel %vm228, 1, 0
      %v231 = vcvt.s32.f32 %v229
      %v232 = vcvt.s32.f32 %v230
      %233 = vset.pattern.permute.xlu0 0
      %234 = vperm.xlu0 %233, %v157
      %v235 = vpop.permute.xlu0 %234
      %236 = vset.pattern.permute.xlu0 0
      %237 = vperm.xlu0 %236, %v158
      %v238 = vpop.permute.xlu0 %237
      %vm239 = vcmp.eq.s32.totalorder %v160, %v235
      %vm240 = vcmp.eq.s32.totalorder %v160, %v238
      %v241 = vsel %vm239, 1, 0
      %v242 = vsel %vm240, 1, 0
      %v243 = vcvt.s32.f32 %v241
      %v244 = vcvt.s32.f32 %v242
      %v245 = vperm.slane %v146, 0
      %v246 = vmul.f32 %v231, %v245
      %v247 = vmul.f32 %v232, %v245
      %vm248 = vcmp.eq.s32.totalorder %v224, %v160
      %vm249 = vcmp.eq.s32.totalorder %v225, %v160
      %v250 = vsel %vm248, 1, 0
      %v251 = vsel %vm249, 1, 0
      %v252 = vcvt.s32.f32 %v250
      %v253 = vcvt.s32.f32 %v251
      %v254 = vperm.slane %v145, 0
      %v255 = vmul.f32 %v252, %v254
      %v256 = vmul.f32 %v253, %v254
      %vm257 = vcmask 97280
      %v259 = vsel %vm257, %v246, 0
      %v262 = vsel %vm257, %v247, 0
      %vm264 = vcmask 1043456
      %v266 = vsel %vm264, %v244, 0
      %268 = vmatpush.msra.mxu0 0.0
      %269 = vmatpush.msra.mxu0 0.0
      %270 = vmatpush.msra.mxu0 0.0
      %271 = vmatpush.msra.mxu0 0.0
      %272 = vmatpush.msra.mxu0 0.0
      %273 = vmatpush.msra.mxu0 0.0
      %274 = vmatpush.msra.mxu0 0.0
      %275 = vmatpush.msra.mxu0 0.0
      %276 = vmatpush.msra.mxu0 0.0
      %277 = vmatpush.msra.mxu0 0.0
      %278 = vmatpush.msra.mxu0 0.0
      %279 = vmatpush.msra.mxu0 0.0
      %280 = vmatpush.msra.mxu0 0.0
      %281 = vmatpush.msra.mxu0 0.0
      %282 = vmatpush.msra.mxu0 %v266
      %283 = vmatpush.msra.mxu0 %v243
      %284 = vmatmul.f32.gmra.mxu0 %v259
      %v285 = vpop.f32.mrf.mxu0
      %v286 = vadd.f32 %v255, %v285
      %287 = vmatmul.f32.gmra.mxu0 %v262
      %v288 = vpop.f32.mrf.mxu0
      %v289 = vadd.f32 %v256, %v288
      %290 = vdwg.mxu0
      %v291 = vperm.slane %v148, 0
      %vm292 = vcmp.eq.s32.totalorder %v224, %v291
      %v293 = vsel %vm292, 1, 0
      %v294 = vcvt.s32.f32 %v293
      %vm295 = vcmask 130048
      %v297 = vsel %vm295, %v286, 0
      %v300 = vsel %vm295, %v289, 0
      %302 = vmatpush.msra.mxu0 0.0
      %303 = vmatpush.msra.mxu0 0.0
      %304 = vmatpush.msra.mxu0 0.0
      %305 = vmatpush.msra.mxu0 0.0
      %306 = vmatpush.msra.mxu0 0.0
      %307 = vmatpush.msra.mxu0 0.0
      %308 = vmatpush.msra.mxu0 0.0
      %309 = vmatpush.msra.mxu0 0.0
      %310 = vmatpush.msra.mxu0 0.0
      %311 = vmatpush.msra.mxu0 0.0
      %312 = vmatpush.msra.mxu0 0.0
      %313 = vmatpush.msra.mxu0 0.0
      %314 = vmatpush.msra.mxu0 0.0
      %315 = vmatpush.msra.mxu0 0.0
      %316 = vmatpush.msra.mxu0 %v221
      %317 = vmatpush.msra.mxu0 %v218
      %318 = vmatmul.f32.gmra.mxu0 %v297
      %v319 = vpop.f32.mrf.mxu0
      %v320 = vadd.f32 0.0, %v319
      %321 = vmatmul.f32.gmra.mxu0 %v300
      %v322 = vpop.f32.mrf.mxu0
      %v323 = vadd.f32 0.0, %v322
      %324 = vdwg.mxu0
      %v325 = vld [vmem:[%s0 + $0x18] sm:$0xff]
      %v326 = vld [vmem:[%s0 + $0x20] sm:$0xff]
      %329 = vrot.lane.b32.xlu0 %v325, 112
      %v330 = vpop.permute.xlu0 %329
      %331 = vrot.lane.b32.xlu0 %v326, 112
      %v332 = vpop.permute.xlu0 %331
      %v336 = vsel %vm295, %v218, 0
      %v339 = vsel %vm295, %v221, 0
      %341 = vmatpush.msra.mxu0 0.0
      %342 = vmatpush.msra.mxu0 0.0
      %343 = vmatpush.msra.mxu0 0.0
      %344 = vmatpush.msra.mxu0 0.0
      %345 = vmatpush.msra.mxu0 0.0
      %346 = vmatpush.msra.mxu0 0.0
      %347 = vmatpush.msra.mxu0 0.0
      %348 = vmatpush.msra.mxu0 0.0
      %349 = vmatpush.msra.mxu0 0.0
      %350 = vmatpush.msra.mxu0 0.0
      %351 = vmatpush.msra.mxu0 0.0
      %352 = vmatpush.msra.mxu0 0.0
      %353 = vmatpush.msra.mxu0 0.0
      %354 = vmatpush.msra.mxu0 0.0
      %355 = vmatpush.msra.mxu0 %v332
      %356 = vmatpush.msra.mxu0 %v330
      %357 = vmatmul.f32.gmra.mxu0 %v336
      %v358 = vpop.f32.mrf.mxu0
      %v359 = vadd.f32 0.0, %v358
      %360 = vmatmul.f32.gmra.mxu0 %v339
      %v361 = vpop.f32.mrf.mxu0
      %v362 = vadd.f32 0.0, %v361
      %363 = vdwg.mxu0
      %v365 = vsel %vm295, %v320, 0
      %v368 = vsel %vm295, %v323, 0
      %370 = vmatpush.msra.mxu0 0.0
      %371 = vmatpush.msra.mxu0 0.0
      %372 = vmatpush.msra.mxu0 0.0
      %373 = vmatpush.msra.mxu0 0.0
      %374 = vmatpush.msra.mxu0 0.0
      %375 = vmatpush.msra.mxu0 0.0
      %376 = vmatpush.msra.mxu0 0.0
      %377 = vmatpush.msra.mxu0 0.0
      %378 = vmatpush.msra.mxu0 0.0
      %379 = vmatpush.msra.mxu0 0.0
      %380 = vmatpush.msra.mxu0 0.0
      %381 = vmatpush.msra.mxu0 0.0
      %382 = vmatpush.msra.mxu0 0.0
      %383 = vmatpush.msra.mxu0 0.0
      %384 = vmatpush.msra.mxu0 %v326
      %385 = vmatpush.msra.mxu0 %v325
      %386 = vmatmul.f32.gmra.mxu0 %v365
      %v387 = vpop.f32.mrf.mxu0
      %v388 = vadd.f32 %v359, %v387
      %389 = vmatmul.f32.gmra.mxu0 %v368
      %v390 = vpop.f32.mrf.mxu0
      %v391 = vadd.f32 %v362, %v390
      %392 = vdwg.mxu0
      %v393 = vld [vmem:[%s0] sm:$0x1]
      %v394 = vperm.slane %v393, 0
      %v395 = vadd.f32 %v388, %v394
      %v396 = vadd.f32 %v391, %v394
      %v397 = vmul.f32 %v395, 0.999995
      %v398 = vmul.f32 %v396, 0.999995
      %v399 = vtanh.pop %v397
      %v400 = vtanh.pop %v398
      %401 = vrot.lane.b32.xlu0 %v325, 64
      %v402 = vpop.permute.xlu0 %401
      %403 = vrot.lane.b32.xlu0 %v326, 64
      %v404 = vpop.permute.xlu0 %403
      %407 = vmatpush.msra.mxu0 0.0
      %408 = vmatpush.msra.mxu0 0.0
      %409 = vmatpush.msra.mxu0 0.0
      %410 = vmatpush.msra.mxu0 0.0
      %411 = vmatpush.msra.mxu0 0.0
      %412 = vmatpush.msra.mxu0 0.0
      %413 = vmatpush.msra.mxu0 0.0
      %414 = vmatpush.msra.mxu0 0.0
      %415 = vmatpush.msra.mxu0 0.0
      %416 = vmatpush.msra.mxu0 0.0
      %417 = vmatpush.msra.mxu0 0.0
      %418 = vmatpush.msra.mxu0 0.0
      %419 = vmatpush.msra.mxu0 0.0
      %420 = vmatpush.msra.mxu0 0.0
      %421 = vmatpush.msra.mxu0 %v404
      %422 = vmatpush.msra.mxu0 %v402
      %423 = vmatmul.f32.gmra.mxu0 %v336
      %v424 = vpop.f32.mrf.mxu0
      %v425 = vadd.f32 0.0, %v424
      %426 = vmatmul.f32.gmra.mxu0 %v339
      %v427 = vpop.f32.mrf.mxu0
      %v428 = vadd.f32 0.0, %v427
      %429 = vdwg.mxu0
      %430 = vrot.lane.b32.xlu0 %v325, 96
      %v431 = vpop.permute.xlu0 %430
      %432 = vrot.lane.b32.xlu0 %v326, 96
      %v433 = vpop.permute.xlu0 %432
      %v437 = vsel %vm295, %v399, 0
      %v440 = vsel %vm295, %v400, 0
      %442 = vmatpush.msra.mxu0 0.0
      %443 = vmatpush.msra.mxu0 0.0
      %444 = vmatpush.msra.mxu0 0.0
      %445 = vmatpush.msra.mxu0 0.0
      %446 = vmatpush.msra.mxu0 0.0
      %447 = vmatpush.msra.mxu0 0.0
      %448 = vmatpush.msra.mxu0 0.0
      %449 = vmatpush.msra.mxu0 0.0
      %450 = vmatpush.msra.mxu0 0.0
      %451 = vmatpush.msra.mxu0 0.0
      %452 = vmatpush.msra.mxu0 0.0
      %453 = vmatpush.msra.mxu0 0.0
      %454 = vmatpush.msra.mxu0 0.0
      %455 = vmatpush.msra.mxu0 0.0
      %456 = vmatpush.msra.mxu0 %v433
      %457 = vmatpush.msra.mxu0 %v431
      %458 = vmatmul.f32.gmra.mxu0 %v437
      %v459 = vpop.f32.mrf.mxu0
      %v460 = vadd.f32 %v425, %v459
      %461 = vmatmul.f32.gmra.mxu0 %v440
      %v462 = vpop.f32.mrf.mxu0
      %v463 = vadd.f32 %v428, %v462
      %464 = vdwg.mxu0
      %466 = vrot.lane.b32.xlu0 %v394, 112
      %v467 = vpop.permute.xlu0 %466
      %v469 = vadd.f32 %v460, %v467
      %v470 = vadd.f32 %v463, %v467
      %v471 = vld [vmem:[%s0 + $0x28] sm:$0xff]
      %v472 = vld [vmem:[%s0 + $0x30] sm:$0xff]
      %473 = vmatpush.msra.mxu0 0.0
      %474 = vmatpush.msra.mxu0 0.0
      %475 = vmatpush.msra.mxu0 0.0
      %476 = vmatpush.msra.mxu0 0.0
      %477 = vmatpush.msra.mxu0 0.0
      %478 = vmatpush.msra.mxu0 0.0
      %479 = vmatpush.msra.mxu0 0.0
      %480 = vmatpush.msra.mxu0 0.0
      %481 = vmatpush.msra.mxu0 0.0
      %482 = vmatpush.msra.mxu0 0.0
      %483 = vmatpush.msra.mxu0 0.0
      %484 = vmatpush.msra.mxu0 0.0
      %485 = vmatpush.msra.mxu0 0.0
      %486 = vmatpush.msra.mxu0 0.0
      %487 = vmatpush.msra.mxu0 %v472
      %488 = vmatpush.msra.mxu0 %v471
      %489 = vmatmul.f32.gmra.mxu0 %v336
      %v490 = vpop.f32.mrf.mxu0
      %v491 = vadd.f32 0.0, %v490
      %492 = vmatmul.f32.gmra.mxu0 %v339
      %v493 = vpop.f32.mrf.mxu0
      %v494 = vadd.f32 0.0, %v493
      %495 = vdwg.mxu0
      %496 = vrot.lane.b32.xlu0 %v325, 32
      %v497 = vpop.permute.xlu0 %496
      %498 = vrot.lane.b32.xlu0 %v326, 32
      %v499 = vpop.permute.xlu0 %498
      %502 = vmatpush.msra.mxu0 0.0
      %503 = vmatpush.msra.mxu0 0.0
      %504 = vmatpush.msra.mxu0 0.0
      %505 = vmatpush.msra.mxu0 0.0
      %506 = vmatpush.msra.mxu0 0.0
      %507 = vmatpush.msra.mxu0 0.0
      %508 = vmatpush.msra.mxu0 0.0
      %509 = vmatpush.msra.mxu0 0.0
      %510 = vmatpush.msra.mxu0 0.0
      %511 = vmatpush.msra.mxu0 0.0
      %512 = vmatpush.msra.mxu0 0.0
      %513 = vmatpush.msra.mxu0 0.0
      %514 = vmatpush.msra.mxu0 0.0
      %515 = vmatpush.msra.mxu0 0.0
      %516 = vmatpush.msra.mxu0 %v499
      %517 = vmatpush.msra.mxu0 %v497
      %518 = vmatmul.f32.gmra.mxu0 %v437
      %v519 = vpop.f32.mrf.mxu0
      %v520 = vadd.f32 %v491, %v519
      %521 = vmatmul.f32.gmra.mxu0 %v440
      %v522 = vpop.f32.mrf.mxu0
      %v523 = vadd.f32 %v494, %v522
      %524 = vdwg.mxu0
      %525 = vrot.lane.b32.xlu0 %v394, 80
      %v526 = vpop.permute.xlu0 %525
      %v528 = vadd.f32 %v520, %v526
      %v529 = vadd.f32 %v523, %v526
      %v530 = vxor.u32 %v469, 2147483648
      %v531 = vxor.u32 %v470, 2147483648
      %v532 = vmul.f32 %v530, 1.442695
      %v533 = vpow.pop %v532
      %v534 = vmul.f32 %v531, 1.442695
      %v535 = vpow.pop %v534
      %v536 = vadd.f32 %v533, 1.0
      %v537 = vadd.f32 %v535, 1.0
      %v538 = vrcp.pop %v536
      %v539 = vmul.f32 %v536, %v538
      %v540 = vsub.f32 1.0, %v539
      %v541 = vmul.f32 %v538, %v540
      %v542 = vadd.f32 %v538, %v541
      %vm543 = vweird.f32 %v536
      %vm544 = vweird.f32 %v538
      %vm545 = vmor %vm543, %vm544
      %v546 = vsel %vm545, %v538, %v542
      %v547 = vand.u32 2147483647, %v536
      %vm548 = vcmp.eq.f32.partialorder %v547, 8.507059e+37
      %v549 = vand.u32 %v536, 2147483648
      %v550 = vor.u32 1.1754944e-38, %v549
      %v551 = vsel %vm548, %v550, %v546
      %v552 = vmul.f32 1.0, %v551
      %v553 = vrcp.pop %v537
      %v554 = vmul.f32 %v537, %v553
      %v555 = vsub.f32 1.0, %v554
      %v556 = vmul.f32 %v553, %v555
      %v557 = vadd.f32 %v553, %v556
      %vm558 = vweird.f32 %v537
      %vm559 = vweird.f32 %v553
      %vm560 = vmor %vm558, %vm559
      %v561 = vsel %vm560, %v553, %v557
      %v562 = vand.u32 2147483647, %v537
      %vm563 = vcmp.eq.f32.partialorder %v562, 8.507059e+37
      %v564 = vand.u32 %v537, 2147483648
      %v565 = vor.u32 1.1754944e-38, %v564
      %v566 = vsel %vm563, %v565, %v561
      %v567 = vmul.f32 1.0, %v566
      %v568 = vtanh.pop %v528
      %v569 = vtanh.pop %v529
      %v570 = vmul.f32 %v552, %v568
      %v571 = vmul.f32 %v567, %v569
      %v573 = vsel %vm295, %v294, 0
      %575 = vmatpush.msra.mxu0 0.0
      %576 = vmatpush.msra.mxu0 0.0
      %577 = vmatpush.msra.mxu0 0.0
      %578 = vmatpush.msra.mxu0 0.0
      %579 = vmatpush.msra.mxu0 0.0
      %580 = vmatpush.msra.mxu0 0.0
      %581 = vmatpush.msra.mxu0 0.0
      %582 = vmatpush.msra.mxu0 0.0
      %583 = vmatpush.msra.mxu0 0.0
      %584 = vmatpush.msra.mxu0 0.0
      %585 = vmatpush.msra.mxu0 0.0
      %586 = vmatpush.msra.mxu0 0.0
      %587 = vmatpush.msra.mxu0 0.0
      %588 = vmatpush.msra.mxu0 0.0
      %589 = vmatpush.msra.mxu0 %v571
      %590 = vmatpush.msra.mxu0 %v570
      %591 = vmatmul.f32.gmra.mxu0 %v573
      %v592 = vpop.f32.mrf.mxu0
      %v593 = vadd.f32 0.0, %v592
      %594 = vdwg.mxu0
      %595 = vrot.lane.b32.xlu0 %v394, 48
      %v596 = vpop.permute.xlu0 %595
      %v599 = vsel %vm193, %v593, 0
      %601 = vmatpush.msra.mxu0 0.0
      %602 = vmatpush.msra.mxu0 0.0
      %603 = vmatpush.msra.mxu0 0.0
      %604 = vmatpush.msra.mxu0 0.0
      %605 = vmatpush.msra.mxu0 0.0
      %606 = vmatpush.msra.mxu0 0.0
      %607 = vmatpush.msra.mxu0 0.0
      %608 = vmatpush.msra.mxu0 0.0
      %609 = vmatpush.msra.mxu0 0.0
      %610 = vmatpush.msra.mxu0 0.0
      %611 = vmatpush.msra.mxu0 0.0
      %612 = vmatpush.msra.mxu0 0.0
      %613 = vmatpush.msra.mxu0 %v176
      %614 = vmatpush.msra.mxu0 %v175
      %615 = vmatpush.msra.mxu0 %v174
      %616 = vmatpush.msra.mxu0 %v173
      %617 = vmatmul.f32.gmra.mxu0 %v599
      %v618 = vpop.f32.mrf.mxu0
      %v619 = vadd.f32 %v596, %v618
      %620 = vdwg.mxu0
      %v621 = vmul.f32 %v619, 0.999995
      %622 = vrot.lane.b32.xlu0 %v173, 120
      %v623 = vpop.permute.xlu0 %622
      %624 = vrot.lane.b32.xlu0 %v174, 120
      %v625 = vpop.permute.xlu0 %624
      %626 = vrot.lane.b32.xlu0 %v175, 120
      %v627 = vpop.permute.xlu0 %626
      %628 = vrot.lane.b32.xlu0 %v176, 120
      %v629 = vpop.permute.xlu0 %628
      %634 = vrot.lane.b32.xlu0 %v394, 40
      %v635 = vpop.permute.xlu0 %634
      %637 = vmatpush.msra.mxu0 0.0
      %638 = vmatpush.msra.mxu0 0.0
      %639 = vmatpush.msra.mxu0 0.0
      %640 = vmatpush.msra.mxu0 0.0
      %641 = vmatpush.msra.mxu0 0.0
      %642 = vmatpush.msra.mxu0 0.0
      %643 = vmatpush.msra.mxu0 0.0
      %644 = vmatpush.msra.mxu0 0.0
      %645 = vmatpush.msra.mxu0 0.0
      %646 = vmatpush.msra.mxu0 0.0
      %647 = vmatpush.msra.mxu0 0.0
      %648 = vmatpush.msra.mxu0 0.0
      %649 = vmatpush.msra.mxu0 %v629
      %650 = vmatpush.msra.mxu0 %v627
      %651 = vmatpush.msra.mxu0 %v625
      %652 = vmatpush.msra.mxu0 %v623
      %653 = vmatmul.f32.gmra.mxu0 %v599
      %v654 = vpop.f32.mrf.mxu0
      %v655 = vadd.f32 %v635, %v654
      %656 = vdwg.mxu0
      %v657 = vld [vmem:[%s0 + $0x8] sm:$0x1]
      %v658 = vperm.slane %v657, 0
      %659 = vrot.lane.b32.xlu0 %v173, 112
      %v660 = vpop.permute.xlu0 %659
      %661 = vrot.lane.b32.xlu0 %v174, 112
      %v662 = vpop.permute.xlu0 %661
      %663 = vrot.lane.b32.xlu0 %v175, 112
      %v664 = vpop.permute.xlu0 %663
      %665 = vrot.lane.b32.xlu0 %v176, 112
      %v666 = vpop.permute.xlu0 %665
      %v672 = vsel %vm193, %v144, 0
      %674 = vmatpush.msra.mxu0 0.0
      %675 = vmatpush.msra.mxu0 0.0
      %676 = vmatpush.msra.mxu0 0.0
      %677 = vmatpush.msra.mxu0 0.0
      %678 = vmatpush.msra.mxu0 0.0
      %679 = vmatpush.msra.mxu0 0.0
      %680 = vmatpush.msra.mxu0 0.0
      %681 = vmatpush.msra.mxu0 0.0
      %682 = vmatpush.msra.mxu0 0.0
      %683 = vmatpush.msra.mxu0 0.0
      %684 = vmatpush.msra.mxu0 0.0
      %685 = vmatpush.msra.mxu0 0.0
      %686 = vmatpush.msra.mxu0 %v666
      %687 = vmatpush.msra.mxu0 %v664
      %688 = vmatpush.msra.mxu0 %v662
      %689 = vmatpush.msra.mxu0 %v660
      %690 = vmatmul.f32.gmra.mxu0 %v672
      %v691 = vpop.f32.mrf.mxu0
      %v692 = vadd.f32 %v658, %v691
      %693 = vdwg.mxu0
      %v694 = vtanh.pop %v692
      %v695 = vld [vmem:[%s0 + $0x58] sm:$0xff]
      %v696 = vld [vmem:[%s0 + $0x60] sm:$0xff]
      %v697 = vld [vmem:[%s0 + $0x68] sm:$0xff]
      %v698 = vld [vmem:[%s0 + $0x70] sm:$0xff]
      %v699 = vld [vmem:[%s0 + $0x78] sm:$0xff]
      %v700 = vld [vmem:[%s0 + $0x80] sm:$0xff]
      %v701 = vld [vmem:[%s0 + $0x88] sm:$0xff]
      %v702 = vld [vmem:[%s0 + $0x90] sm:$0xff]
      %704 = vrot.lane.b32.xlu0 %v658, 64
      %v705 = vpop.permute.xlu0 %704
      %vm707 = vcmask 523264
      %v709 = vsel %vm707, %v694, 0
      %711 = vmatpush.msra.mxu0 0.0
      %712 = vmatpush.msra.mxu0 0.0
      %713 = vmatpush.msra.mxu0 0.0
      %714 = vmatpush.msra.mxu0 0.0
      %715 = vmatpush.msra.mxu0 0.0
      %716 = vmatpush.msra.mxu0 0.0
      %717 = vmatpush.msra.mxu0 0.0
      %718 = vmatpush.msra.mxu0 0.0
      %719 = vmatpush.msra.mxu0 %v702
      %720 = vmatpush.msra.mxu0 %v701
      %721 = vmatpush.msra.mxu0 %v700
      %722 = vmatpush.msra.mxu0 %v699
      %723 = vmatpush.msra.mxu0 %v698
      %724 = vmatpush.msra.mxu0 %v697
      %725 = vmatpush.msra.mxu0 %v696
      %726 = vmatpush.msra.mxu0 %v695
      %727 = vmatmul.f32.gmra.mxu0 %v709
      %v728 = vpop.f32.mrf.mxu0
      %v729 = vadd.f32 %v705, %v728
      %730 = vdwg.mxu0
      %v731 = vtanh.pop %v729
      %732 = vrot.lane.b32.xlu0 %v173, 48
      %v733 = vpop.permute.xlu0 %732
      %734 = vrot.lane.b32.xlu0 %v174, 48
      %v735 = vpop.permute.xlu0 %734
      %736 = vrot.lane.b32.xlu0 %v175, 48
      %v737 = vpop.permute.xlu0 %736
      %738 = vrot.lane.b32.xlu0 %v176, 48
      %v739 = vpop.permute.xlu0 %738
      %744 = vrot.lane.b32.xlu0 %v658, 32
      %v745 = vpop.permute.xlu0 %744
      %v748 = vsel %vm193, %v731, 0
      %750 = vmatpush.msra.mxu0 0.0
      %751 = vmatpush.msra.mxu0 0.0
      %752 = vmatpush.msra.mxu0 0.0
      %753 = vmatpush.msra.mxu0 0.0
      %754 = vmatpush.msra.mxu0 0.0
      %755 = vmatpush.msra.mxu0 0.0
      %756 = vmatpush.msra.mxu0 0.0
      %757 = vmatpush.msra.mxu0 0.0
      %758 = vmatpush.msra.mxu0 0.0
      %759 = vmatpush.msra.mxu0 0.0
      %760 = vmatpush.msra.mxu0 0.0
      %761 = vmatpush.msra.mxu0 0.0
      %762 = vmatpush.msra.mxu0 %v739
      %763 = vmatpush.msra.mxu0 %v737
      %764 = vmatpush.msra.mxu0 %v735
      %765 = vmatpush.msra.mxu0 %v733
      %766 = vmatmul.f32.gmra.mxu0 %v748
      %v767 = vpop.f32.mrf.mxu0
      %v768 = vadd.f32 %v745, %v767
      %769 = vdwg.mxu0
      %770 = vrot.lane.b32.xlu0 %v173, 40
      %v771 = vpop.permute.xlu0 %770
      %772 = vrot.lane.b32.xlu0 %v174, 40
      %v773 = vpop.permute.xlu0 %772
      %774 = vrot.lane.b32.xlu0 %v175, 40
      %v775 = vpop.permute.xlu0 %774
      %776 = vrot.lane.b32.xlu0 %v176, 40
      %v777 = vpop.permute.xlu0 %776
      %782 = vrot.lane.b32.xlu0 %v658, 24
      %v783 = vpop.permute.xlu0 %782
      %785 = vmatpush.msra.mxu0 0.0
      %786 = vmatpush.msra.mxu0 0.0
      %787 = vmatpush.msra.mxu0 0.0
      %788 = vmatpush.msra.mxu0 0.0
      %789 = vmatpush.msra.mxu0 0.0
      %790 = vmatpush.msra.mxu0 0.0
      %791 = vmatpush.msra.mxu0 0.0
      %792 = vmatpush.msra.mxu0 0.0
      %793 = vmatpush.msra.mxu0 0.0
      %794 = vmatpush.msra.mxu0 0.0
      %795 = vmatpush.msra.mxu0 0.0
      %796 = vmatpush.msra.mxu0 0.0
      %797 = vmatpush.msra.mxu0 %v777
      %798 = vmatpush.msra.mxu0 %v775
      %799 = vmatpush.msra.mxu0 %v773
      %800 = vmatpush.msra.mxu0 %v771
      %801 = vmatmul.f32.gmra.mxu0 %v748
      %v802 = vpop.f32.mrf.mxu0
      %v803 = vadd.f32 %v783, %v802
      %804 = vdwg.mxu0
      %v805 = vld [vmem:[%s0 + $0x8] sm:$0xff]
      %807 = vrot.lane.b32.xlu0 %v805, 16
      %v808 = vpop.permute.xlu0 %807
      %810 = vrot.lane.b32.xlu0 %v658, 8
      %v811 = vpop.permute.xlu0 %810
      %vm813 = vcmask 64512
      %v815 = vsel %vm813, %v768, 0
      %817 = vmatpush.msra.mxu0 0.0
      %818 = vmatpush.msra.mxu0 0.0
      %819 = vmatpush.msra.mxu0 0.0
      %820 = vmatpush.msra.mxu0 0.0
      %821 = vmatpush.msra.mxu0 0.0
      %822 = vmatpush.msra.mxu0 0.0
      %823 = vmatpush.msra.mxu0 0.0
      %824 = vmatpush.msra.mxu0 0.0
      %825 = vmatpush.msra.mxu0 0.0
      %826 = vmatpush.msra.mxu0 0.0
      %827 = vmatpush.msra.mxu0 0.0
      %828 = vmatpush.msra.mxu0 0.0
      %829 = vmatpush.msra.mxu0 0.0
      %830 = vmatpush.msra.mxu0 0.0
      %831 = vmatpush.msra.mxu0 0.0
      %832 = vmatpush.msra.mxu0 %v808
      %833 = vmatmul.f32.gmra.mxu0 %v815
      %v834 = vpop.f32.mrf.mxu0
      %v835 = vadd.f32 %v811, %v834
      %836 = vdwg.mxu0
      %vm837 = vcmask 58368
      %v838 = vsel %vm837, %v835, -inf
      %839 = vmax.xlane.f32.xlu0 %v838
      %v840 = vpop.xlane.xlu0 %839
      %v841 = vsub.f32 %v835, %v840
      %v842 = vmul.f32 %v841, 1.442695
      %v843 = vpow.pop %v842
      %v844 = vsel %vm837, %v843, 0.0
      %845 = vadd.xlane.f32.xlu0 %v844
      %v846 = vpop.xlane.xlu0 %845
      %v847 = vrcp.pop %v846
      %v848 = vmul.f32 %v846, %v847
      %v849 = vsub.f32 1.0, %v848
      %v850 = vmul.f32 %v847, %v849
      %v851 = vadd.f32 %v847, %v850
      %vm852 = vweird.f32 %v846
      %vm853 = vweird.f32 %v847
      %vm854 = vmor %vm852, %vm853
      %v855 = vsel %vm854, %v847, %v851
      %v856 = vand.u32 2147483647, %v846
      %vm857 = vcmp.eq.f32.partialorder %v856, 8.507059e+37
      %v858 = vand.u32 %v846, 2147483648
      %v859 = vor.u32 1.1754944e-38, %v858
      %v860 = vsel %vm857, %v859, %v855
      %v861 = vmul.f32 %v843, %v860
      %v862 = vld [vmem:[%s0 + $0x10] sm:$0xff]
      %v864 = vsel %vm813, %v861, 0
      %866 = vmatpush.msra.mxu0 0.0
      %867 = vmatpush.msra.mxu0 0.0
      %868 = vmatpush.msra.mxu0 0.0
      %869 = vmatpush.msra.mxu0 0.0
      %870 = vmatpush.msra.mxu0 0.0
      %871 = vmatpush.msra.mxu0 0.0
      %872 = vmatpush.msra.mxu0 0.0
      %873 = vmatpush.msra.mxu0 0.0
      %874 = vmatpush.msra.mxu0 0.0
      %875 = vmatpush.msra.mxu0 0.0
      %876 = vmatpush.msra.mxu0 0.0
      %877 = vmatpush.msra.mxu0 0.0
      %878 = vmatpush.msra.mxu0 0.0
      %879 = vmatpush.msra.mxu0 0.0
      %880 = vmatpush.msra.mxu0 0.0
      %881 = vmatpush.msra.mxu0 %v862
      %882 = vmatmul.f32.gmra.mxu0 %v864
      %v883 = vpop.f32.mrf.mxu0
      %v884 = vadd.f32 1e-10, %v883
      %885 = vdwg.mxu0
      %v886 = vlog2.pop %v884
      %v887 = vmul.f32 %v886, 0.6931472
      %v888 = vmul.f32 %v144, %v887
      %vm889 = vcmask 254976
      %v890 = vsel %vm889, %v888, 0.0
      %891 = vadd.xlane.f32.xlu0 %v890
      %v892 = vpop.xlane.xlu0 %891
      %v893 = vsub.f32 0.0, %v892
      %v894 = vmul.f32 %v655, 1.442695
      %v895 = vpow.pop %v894
      %v896 = vmul.f32 %v803, 1.442695
      %v897 = vpow.pop %v896
      %v898 = vsub.f32 %v803, %v655
      %v899 = vsub.f32 %v621, %v768
      %v900 = vmul.f32 %v899, %v899
      %v901 = vadd.f32 %v895, %v900
      %v902 = vrcp.pop %v897
      %v903 = vmul.f32 %v897, %v902
      %v904 = vsub.f32 1.0, %v903
      %v905 = vmul.f32 %v902, %v904
      %v906 = vadd.f32 %v902, %v905
      %vm907 = vweird.f32 %v897
      %vm908 = vweird.f32 %v902
      %vm909 = vmor %vm907, %vm908
      %v910 = vsel %vm909, %v902, %v906
      %v911 = vand.u32 2147483647, %v897
      %vm912 = vcmp.eq.f32.partialorder %v911, 8.507059e+37
      %v913 = vand.u32 %v897, 2147483648
      %v914 = vor.u32 1.1754944e-38, %v913
      %v915 = vsel %vm912, %v914, %v910
      %v916 = vmul.f32 %v901, %v915
      %v917 = vadd.f32 %v898, %v916
      %v918 = vsub.f32 %v917, 1.0
      %v919 = vsel %vm837, %v918, 0.0
      %920 = vadd.xlane.f32.xlu0 %v919
      %v921 = vpop.xlane.xlu0 %920
      %v922 = vmul.f32 %v921, 0.5
      %v923 = vmul.f32 %v621, %v621
      %v924 = vsub.f32 1.0, %v923
      %v925 = vadd.f32 %v924, %v655
      %v926 = vsub.f32 %v925, %v895
      %v927 = vsel %vm837, %v926, 0.0
      %928 = vadd.xlane.f32.xlu0 %v927
      %v929 = vpop.xlane.xlu0 %928
      %v930 = vmul.f32 %v929, -0.5
      %v931 = vadd.f32 %v893, %v922
      %v932 = vadd.f32 %v931, %v930
      %vm933 = vcmask 1041408
      %v934 = vsel %vm933, %v932, 0.0
      %v935 = vrot.slane %v934, 4
      %v936 = vadd.f32 %v934, %v935
      %v937 = vrot.slane %v936, 2
      %v938 = vadd.f32 %v936, %v937
      %v939 = vrot.slane %v938, 1
      %v940 = vadd.f32 %v938, %v939
      %v941 = vmul.f32 %v940, 0.5
      %v942 = vsel %vm933, %v893, 0.0
      %v943 = vrot.slane %v942, 4
      %v944 = vadd.f32 %v942, %v943
      %v945 = vrot.slane %v944, 2
      %v946 = vadd.f32 %v944, %v945
      %v947 = vrot.slane %v946, 1
      %v948 = vadd.f32 %v946, %v947
      %v949 = vmul.f32 %v948, 0.5
      %v950 = vsel %vm933, %v922, 0.0
      %v951 = vrot.slane %v950, 4
      %v952 = vadd.f32 %v950, %v951
      %v953 = vrot.slane %v952, 2
      %v954 = vadd.f32 %v952, %v953
      %v955 = vrot.slane %v954, 1
      %v956 = vadd.f32 %v954, %v955
      %v957 = vmul.f32 %v956, 0.5
      %v958 = vsel %vm933, %v930, 0.0
      %v959 = vrot.slane %v958, 4
      %v960 = vadd.f32 %v958, %v959
      %v961 = vrot.slane %v960, 2
      %v962 = vadd.f32 %v960, %v961
      %v963 = vrot.slane %v962, 1
      %v964 = vadd.f32 %v962, %v963
      %v965 = vmul.f32 %v964, 0.5
      %v966 = vsel %vm813, %v861, %v893
      %vm967 = vcmask 72704
      %v968 = vsel %vm967, %v966, %v922
      %vm969 = vcmask 80896
      %v970 = vsel %vm969, %v968, %v930
      %vm971 = vcmask 89088
      %v972 = vsel %vm971, %v970, 0.0
      %vm973 = vcmask 7168
      %v974 = vsel %vm973, %v941, %v949
      %vm975 = vcmask 15360
      %v976 = vsel %vm975, %v974, %v957
      %vm977 = vcmask 23552
      %v978 = vsel %vm977, %v976, %v965
      %vm979 = vcmask 31744
      %v980 = vsel %vm979, %v978, 0.0
      %v982 = vrot.slane %v980, 6
      %v984 = vsel %vm933, %v972, %v982
      %vm985 = vcmask 1042432
      %v986 = vsel %vm985, %v984, 0.0
      %987 = vst [vmem:[%s143] sm:$0xff] %v986
      %p988 = scmp.lt.s32.totalorder %s13, 3
      %s989 = scalar_select %p988, %s13, 3
      %s990 = smul.addr %s989, 8
      %s991 = scalar_lea.vmem %s2, %s990
      // Predicated region
      $region29: #{_forward_batched.1} parent=27 // pred_check
        %p992 = pneg %p78
      $region30: #{_forward_batched.1} parent=27 // pred_check_branch
        %994 = sbr.rel (%p992) target = $region32
      $region31: #{_forward_batched.1} parent=27 // pred_region
        _
      $region32: #{_forward_batched.1} parent=27 // pred_fallthru
        _
    $region28: #{_forward_batched.1} parent=5 // pred_fallthru
      _
    %p995 = scmp.le.s32.totalorder 2, %s8
    // Predicated region
    $region33: #{_forward_batched.1} parent=5 // pred_check
      %p996 = pneg %p995
    $region34: #{_forward_batched.1} parent=5 // pred_check_branch
      %998 = sbr.rel (%p996) target = $region36
    $region35: #{_forward_batched.1} parent=5 // pred_region
      %s999 = ssub.s32 %s8, 2
      // Predicated region
      $region37: #{_forward_batched.1} parent=35 // pred_check
        %p1000 = pneg %p84
      $region38: #{_forward_batched.1} parent=35 // pred_check_branch
        %1002 = sbr.rel (%p1000) target = $region40
      $region39: #{_forward_batched.1} parent=35 // pred_region
        %p1003 = scmp.lt.s32.totalorder %s14, 3
        %s1004 = scalar_select %p1003, %s14, 3
        %s1005 = smul.addr %s1004, 8
        %s1006 = scalar_lea.vmem %s2, %s1005
      $region40: #{_forward_batched.1} parent=35 // pred_fallthru
        _
    $region36: #{_forward_batched.1} parent=5 // pred_fallthru
      _
  $region6: #{_forward_batched.1} parent=0 // loop_footer
    %s12 = sadd.s32 1, %s8
  $region7: #{_forward_batched.1} parent=0 // loop_footer_branch
    %7 = sbr.rel target = $region3
  $region8: #{_forward_batched.1} parent=0 // loop_exit
    _

</llo_original>
